<compile_context>
chip_gen: v6e
topology: v6e:2x2x1
jax: 0.10.0
libtpu: 0.0.40
codegen_flags: <defaults>
</compile_context>

<pallas_src>
import jax
import jax.numpy as jnp
from jax.experimental import pallas as pl
from jax.experimental.pallas import tpu as pltpu

ENCODING_DIM = 10
HIDDEN = 128


def _round_up(x, m):
    return ((x + m - 1) // m) * m


def _autoencoder_kernel(x_ref,
                        w1_ref, b1_ref,     # encoder L1:  [D,H] (compute dtype), [1,H] f32
                        w2_ref, b2_ref,     # encoder L2:  [H,E], [1,E]
                        w23_ref, b23_ref,   # fused w2@w3: [H,H], [1,H]
                        w4_ref, b4_ref,     # decoder L2:  [H,D], [1,D]
                        dec_ref, enc_ref):
    cd = w1_ref.dtype                       # MXU input dtype (f32 or bf16)
    x = x_ref[...]

    # ---- encoder layer 1 (MXU) + bias/ReLU in f32 (VPU) ----
    h1 = jnp.dot(x, w1_ref[...], preferred_element_type=jnp.float32) + b1_ref[...]
    h1 = jnp.maximum(h1, 0.0)
    h1c = h1.astype(cd)

    # ---- encoder layer 2 -> encoded output ----
    enc = jnp.dot(h1c, w2_ref[...], preferred_element_type=jnp.float32) + b2_ref[...]

    # ---- fused encoder-out -> decoder-hidden:
    #      relu(enc @ w3 + b3) == relu(h1 @ (w2@w3) + (b2@w3 + b3))
    #      -> one 128x128 MXU contraction, no K=10 matmul, no serial dep on enc ----
    h2 = jnp.dot(h1c, w23_ref[...], preferred_element_type=jnp.float32) + b23_ref[...]
    h2 = jnp.maximum(h2, 0.0)

    # ---- decoder layer 2 + sigmoid (EUP) ----
    logits = jnp.dot(h2.astype(cd), w4_ref[...],
                     preferred_element_type=jnp.float32) + b4_ref[...]

    dec_ref[...] = jax.nn.sigmoid(logits).astype(dec_ref.dtype)
    enc_ref[...] = enc.astype(enc_ref.dtype)


def autoencoder_forward(x, params, *, block_b=4096, compute_dtype=jnp.float32):
    """Full encoder+decoder forward, batch-tiled over a 1-D Pallas grid."""
    w1, b1, w2, b2, w3, b3, w4, b4 = params
    B, D = x.shape
    H = w1.shape[1]
    E = w2.shape[1]
    f32 = jnp.float32

    # Fuse the two skinny matmuls around the encoding bottleneck (exact math).
    w23 = jnp.dot(w2.astype(f32), w3.astype(f32), preferred_element_type=f32)
    b23 = jnp.dot(b2.astype(f32), w3.astype(f32), preferred_element_type=f32) + b3.astype(f32)

    cd = jnp.dtype(compute_dtype)
    x_c = x.astype(cd)
    w1_c, w2_c, w23_c, w4_c = (w.astype(cd) for w in (w1, w2, w23, w4))
    b1_f, b2_f, b23_f, b4_f = (b.astype(f32) for b in (b1, b2, b23, b4))

    # Batch tile: large (amortizes ~0.35us/step, fills MXU rows), multiple of 8
    # sublanes (default 4096 is also a multiple of 128/256 for the MXU M dim).
    tb = max(8, min(_round_up(block_b, 8), _round_up(B, 8)))
    Bp = _round_up(B, tb)
    if Bp != B:                      # pad to a whole number of tiles
        x_c = jnp.pad(x_c, ((0, Bp - B), (0, 0)))
    grid = (Bp // tb,)

    row = lambda i: (i, 0)           # batch-tiled arrays
    const = lambda i: (0, 0)         # weights/biases: resident, never re-DMA'd

    in_specs = [
        pl.BlockSpec((tb, D), row),
        pl.BlockSpec((D, H), const), pl.BlockSpec((1, H), const),
        pl.BlockSpec((H, E), const), pl.BlockSpec((1, E), const),
        pl.BlockSpec((H, H), const), pl.BlockSpec((1, H), const),
        pl.BlockSpec((H, D), const), pl.BlockSpec((1, D), const),
    ]
    out_specs = (pl.BlockSpec((tb, D), row), pl.BlockSpec((tb, E), row))
    out_shape = (jax.ShapeDtypeStruct((Bp, D), f32),
                 jax.ShapeDtypeStruct((Bp, E), f32))

    itemsize = cd.itemsize
    weight_bytes = ((w1_c.size + w2_c.size + w23_c.size + w4_c.size) * itemsize
                    + (b1_f.size + b2_f.size + b23_f.size + b4_f.size) * 4)
    cost = pl.CostEstimate(
        flops=int(2 * Bp * (D * H + H * E + H * H + H * D)),
        transcendentals=int(Bp * D),                         # sigmoid
        bytes_accessed=int(Bp * D * itemsize + weight_bytes + Bp * (D + E) * 4),
    )

    decoded, encoded = pl.pallas_call(
        _autoencoder_kernel,
        out_shape=out_shape,
        grid=grid,
        in_specs=in_specs,
        out_specs=out_specs,
        compiler_params=pltpu.CompilerParams(
            dimension_semantics=("parallel",),        # v7x: shard batch over 2 TCs
            vmem_limit_bytes=32 * 1024 * 1024,        # explicit, with v7x headroom
        ),
        cost_estimate=cost,
    )(x_c, w1_c, b1_f, w2_c, b2_f, w23_c, b23_f, w4_c, b4_f)

    if Bp != B:
        decoded = decoded[:B]
        encoded = encoded[:B]
    return decoded, encoded


def init_params(key, input_dim, encoding_dim):
    """PyTorch-Linear-style init (U[-1/sqrt(fan_in), 1/sqrt(fan_in)]), weights [in, out]."""
    def linear(k, fan_in, fan_out):
        kw, kb = jax.random.split(k)
        bound = 1.0 / jnp.sqrt(fan_in)
        w = jax.random.uniform(kw, (fan_in, fan_out), jnp.float32, -bound, bound)
        b = jax.random.uniform(kb, (1, fan_out), jnp.float32, -bound, bound)
        return w, b

    k1, k2, k3, k4 = jax.random.split(key, 4)
    w1, b1 = linear(k1, input_dim, HIDDEN)        # encoder Linear(D, 128)
    w2, b2 = linear(k2, HIDDEN, encoding_dim)     # encoder Linear(128, E)
    w3, b3 = linear(k3, encoding_dim, HIDDEN)     # decoder Linear(E, 128)
    w4, b4 = linear(k4, HIDDEN, input_dim)        # decoder Linear(128, D)
    # TODO(synk): discriminator params (Linear(E,64)->ReLU->Linear(64,1)->Sigmoid)
    # are defined in __init__ but unused in forward, so not materialized here.
    return (w1, b1, w2, b2, w3, b3, w4, b4)


def _reference_forward(x, params):
    """Plain-JAX reference in the original (unfused) PyTorch op order."""
    (w1, b1, w2, b2, w3, b3, w4, b4) = params
    enc = jnp.maximum(x @ w1 + b1, 0.0) @ w2 + b2
    dec = jax.nn.sigmoid(jnp.maximum(enc @ w3 + b3, 0.0) @ w4 + b4)
    return dec, enc


if __name__ == "__main__":
    key = jax.random.PRNGKey(0)
    k_data, k_params = jax.random.split(key)

    input_dim = 32                                # stands in for X_train.shape[1]
    params = init_params(k_params, input_dim, ENCODING_DIM)

    # ---- small f32 run (single grid step) ----
    x = jax.random.uniform(k_data, (8, input_dim), jnp.float32)
    dec, enc = jax.block_until_ready(autoencoder_forward(x, params))
    ref_dec, ref_enc = _reference_forward(x, params)
    assert dec.shape == (8, input_dim) and enc.shape == (8, ENCODING_DIM)
    # Tolerance covers MXU default-precision rounding + w2@w3 fusion re-association.
    assert jnp.allclose(dec, ref_dec, atol=1e-2, rtol=1e-2)
    assert jnp.allclose(enc, ref_enc, atol=1e-2, rtol=1e-2)

    # ---- multi-tile run (grid of 3 batch tiles, exercises padding + tiling) ----
    x2 = jax.random.uniform(jax.random.PRNGKey(1), (20, input_dim), jnp.float32)
    dec2, enc2 = jax.block_until_ready(autoencoder_forward(x2, params, block_b=8))
    ref_dec2, ref_enc2 = _reference_forward(x2, params)
    assert dec2.shape == (20, input_dim) and enc2.shape == (20, ENCODING_DIM)
    assert jnp.allclose(dec2, ref_dec2, atol=1e-2, rtol=1e-2)
    assert jnp.allclose(enc2, ref_enc2, atol=1e-2, rtol=1e-2)

    # ---- bf16 MXU-input fast path (f32 accumulation / activations) ----
    dec3, enc3 = jax.block_until_ready(
        autoencoder_forward(x, params, compute_dtype=jnp.bfloat16))
    assert jnp.allclose(dec3, ref_dec, atol=5e-2, rtol=5e-2)
    assert jnp.allclose(enc3, ref_enc, atol=5e-2, rtol=5e-2)

    print("KERNEL_OK")
</pallas_src>

<mosaic_0001>
module attributes {stable_mosaic.version = 11 : i64} {
  func.func @_autoencoder_kernel(%arg0: i32, %arg1: memref<8x32xf32, #tpu.memory_space<vmem>>, %arg2: memref<32x128xf32, #tpu.memory_space<vmem>>, %arg3: memref<1x128xf32, #tpu.memory_space<vmem>>, %arg4: memref<128x10xf32, #tpu.memory_space<vmem>>, %arg5: memref<1x10xf32, #tpu.memory_space<vmem>>, %arg6: memref<128x128xf32, #tpu.memory_space<vmem>>, %arg7: memref<1x128xf32, #tpu.memory_space<vmem>>, %arg8: memref<128x32xf32, #tpu.memory_space<vmem>>, %arg9: memref<1x32xf32, #tpu.memory_space<vmem>>, %arg10: memref<8x32xf32, #tpu.memory_space<vmem>>, %arg11: memref<8x10xf32, #tpu.memory_space<vmem>>) attributes {dimension_semantics = [#tpu.dimension_semantics<parallel>], iteration_bounds = array<i64: 1>, scalar_prefetch = 0 : i64, scratch_operands = 0 : i64, tpu.core_type = #tpu.core_type<tc>, window_params = [{transform_indices = @transform_0, window_bounds = array<i64: 8, 32>}, {pipeline_mode = #tpu.pipeline_mode<synchronous>, transform_indices = @transform_1, window_bounds = array<i64: 32, 128>}, {pipeline_mode = #tpu.pipeline_mode<synchronous>, transform_indices = @transform_2, window_bounds = array<i64: 1, 128>}, {pipeline_mode = #tpu.pipeline_mode<synchronous>, transform_indices = @transform_3, window_bounds = array<i64: 128, 10>}, {pipeline_mode = #tpu.pipeline_mode<synchronous>, transform_indices = @transform_4, window_bounds = array<i64: 1, 10>}, {pipeline_mode = #tpu.pipeline_mode<synchronous>, transform_indices = @transform_5, window_bounds = array<i64: 128, 128>}, {pipeline_mode = #tpu.pipeline_mode<synchronous>, transform_indices = @transform_6, window_bounds = array<i64: 1, 128>}, {pipeline_mode = #tpu.pipeline_mode<synchronous>, transform_indices = @transform_7, window_bounds = array<i64: 128, 32>}, {pipeline_mode = #tpu.pipeline_mode<synchronous>, transform_indices = @transform_8, window_bounds = array<i64: 1, 32>}, {transform_indices = @transform_9, window_bounds = array<i64: 8, 32>}, {transform_indices = @transform_10, window_bounds = array<i64: 8, 10>}]} {
    %c0 = arith.constant 0 : index
    %c0_0 = arith.constant 0 : index
    %0 = vector.load %arg1[%c0, %c0_0] : memref<8x32xf32, #tpu.memory_space<vmem>>, vector<8x32xf32>
    %c0_1 = arith.constant 0 : index
    %c0_2 = arith.constant 0 : index
    %1 = vector.load %arg2[%c0_1, %c0_2] : memref<32x128xf32, #tpu.memory_space<vmem>>, vector<32x128xf32>
    %cst = arith.constant dense<0.000000e+00> : vector<8x128xf32>
    %2 = tpu.matmul %0, %1, %cst {dimension_numbers = #tpu.dot_dimension_numbers<[1], [0], [0], [1], [0, 0, 1, 1], [], []>} : vector<8x32xf32>, vector<32x128xf32>, vector<8x128xf32> -> vector<8x128xf32>
    %c0_3 = arith.constant 0 : index
    %c0_4 = arith.constant 0 : index
    %3 = vector.load %arg3[%c0_3, %c0_4] : memref<1x128xf32, #tpu.memory_space<vmem>>, vector<1x128xf32>
    %4 = vector.broadcast %3 : vector<1x128xf32> to vector<8x128xf32>
    %5 = arith.addf %2, %4 : vector<8x128xf32>
    %cst_5 = arith.constant 0.000000e+00 : f32
    %6 = vector.broadcast %cst_5 : f32 to vector<8x128xf32>
    %7 = arith.maximumf %5, %6 : vector<8x128xf32>
    %c0_6 = arith.constant 0 : index
    %c0_7 = arith.constant 0 : index
    %8 = vector.load %arg4[%c0_6, %c0_7] : memref<128x10xf32, #tpu.memory_space<vmem>>, vector<128x10xf32>
    %cst_8 = arith.constant dense<0.000000e+00> : vector<8x10xf32>
    %9 = tpu.matmul %7, %8, %cst_8 {dimension_numbers = #tpu.dot_dimension_numbers<[1], [0], [0], [1], [0, 0, 1, 1], [], []>} : vector<8x128xf32>, vector<128x10xf32>, vector<8x10xf32> -> vector<8x10xf32>
    %c0_9 = arith.constant 0 : index
    %c0_10 = arith.constant 0 : index
    %10 = vector.load %arg5[%c0_9, %c0_10] : memref<1x10xf32, #tpu.memory_space<vmem>>, vector<1x10xf32>
    %11 = vector.broadcast %10 : vector<1x10xf32> to vector<8x10xf32>
    %12 = arith.addf %9, %11 : vector<8x10xf32>
    %c0_11 = arith.constant 0 : index
    %c0_12 = arith.constant 0 : index
    %13 = vector.load %arg6[%c0_11, %c0_12] : memref<128x128xf32, #tpu.memory_space<vmem>>, vector<128x128xf32>
    %cst_13 = arith.constant dense<0.000000e+00> : vector<8x128xf32>
    %14 = tpu.matmul %7, %13, %cst_13 {dimension_numbers = #tpu.dot_dimension_numbers<[1], [0], [0], [1], [0, 0, 1, 1], [], []>} : vector<8x128xf32>, vector<128x128xf32>, vector<8x128xf32> -> vector<8x128xf32>
    %c0_14 = arith.constant 0 : index
    %c0_15 = arith.constant 0 : index
    %15 = vector.load %arg7[%c0_14, %c0_15] : memref<1x128xf32, #tpu.memory_space<vmem>>, vector<1x128xf32>
    %16 = vector.broadcast %15 : vector<1x128xf32> to vector<8x128xf32>
    %17 = arith.addf %14, %16 : vector<8x128xf32>
    %cst_16 = arith.constant 0.000000e+00 : f32
    %18 = vector.broadcast %cst_16 : f32 to vector<8x128xf32>
    %19 = arith.maximumf %17, %18 : vector<8x128xf32>
    %c0_17 = arith.constant 0 : index
    %c0_18 = arith.constant 0 : index
    %20 = vector.load %arg8[%c0_17, %c0_18] : memref<128x32xf32, #tpu.memory_space<vmem>>, vector<128x32xf32>
    %cst_19 = arith.constant dense<0.000000e+00> : vector<8x32xf32>
    %21 = tpu.matmul %19, %20, %cst_19 {dimension_numbers = #tpu.dot_dimension_numbers<[1], [0], [0], [1], [0, 0, 1, 1], [], []>} : vector<8x128xf32>, vector<128x32xf32>, vector<8x32xf32> -> vector<8x32xf32>
    %c0_20 = arith.constant 0 : index
    %c0_21 = arith.constant 0 : index
    %22 = vector.load %arg9[%c0_20, %c0_21] : memref<1x32xf32, #tpu.memory_space<vmem>>, vector<1x32xf32>
    %23 = vector.broadcast %22 : vector<1x32xf32> to vector<8x32xf32>
    %24 = arith.addf %21, %23 : vector<8x32xf32>
    %25 = arith.negf %24 : vector<8x32xf32>
    %26 = math.exp %25 : vector<8x32xf32>
    %cst_22 = arith.constant 1.000000e+00 : f32
    %27 = vector.broadcast %cst_22 : f32 to vector<8x32xf32>
    %28 = arith.addf %27, %26 : vector<8x32xf32>
    %29 = arith.divf %27, %28 : vector<8x32xf32>
    %c0_23 = arith.constant 0 : index
    %c0_24 = arith.constant 0 : index
    %30 = vector.load %arg10[%c0_23, %c0_24] : memref<8x32xf32, #tpu.memory_space<vmem>>, vector<8x32xf32>
    tpu.vector_store %arg10[%c0_23, %c0_24], %29 {strides = array<i32>} : memref<8x32xf32, #tpu.memory_space<vmem>>, vector<8x32xf32>,
    %c0_25 = arith.constant 0 : index
    %c0_26 = arith.constant 0 : index
    %31 = vector.load %arg11[%c0_25, %c0_26] : memref<8x10xf32, #tpu.memory_space<vmem>>, vector<8x10xf32>
    tpu.vector_store %arg11[%c0_25, %c0_26], %12 {strides = array<i32>} : memref<8x10xf32, #tpu.memory_space<vmem>>, vector<8x10xf32>,
    return
  }
  func.func @transform_0(%arg0: i32) -> (i32, i32) {
    %c0_i32 = arith.constant 0 : i32
    %c0_i32_0 = arith.constant 0 : i32
    return %arg0, %c0_i32 : i32, i32
  }
  func.func @transform_1(%arg0: i32) -> (i32, i32) {
    %c0_i32 = arith.constant 0 : i32
    %c0_i32_0 = arith.constant 0 : i32
    %c0_i32_1 = arith.constant 0 : i32
    return %c0_i32, %c0_i32_0 : i32, i32
  }
  func.func @transform_2(%arg0: i32) -> (i32, i32) {
    %c0_i32 = arith.constant 0 : i32
    %c0_i32_0 = arith.constant 0 : i32
    %c0_i32_1 = arith.constant 0 : i32
    return %c0_i32, %c0_i32_0 : i32, i32
  }
  func.func @transform_3(%arg0: i32) -> (i32, i32) {
    %c0_i32 = arith.constant 0 : i32
    %c0_i32_0 = arith.constant 0 : i32
    %c0_i32_1 = arith.constant 0 : i32
    return %c0_i32, %c0_i32_0 : i32, i32
  }
  func.func @transform_4(%arg0: i32) -> (i32, i32) {
    %c0_i32 = arith.constant 0 : i32
    %c0_i32_0 = arith.constant 0 : i32
    %c0_i32_1 = arith.constant 0 : i32
    return %c0_i32, %c0_i32_0 : i32, i32
  }
  func.func @transform_5(%arg0: i32) -> (i32, i32) {
    %c0_i32 = arith.constant 0 : i32
    %c0_i32_0 = arith.constant 0 : i32
    %c0_i32_1 = arith.constant 0 : i32
    return %c0_i32, %c0_i32_0 : i32, i32
  }
  func.func @transform_6(%arg0: i32) -> (i32, i32) {
    %c0_i32 = arith.constant 0 : i32
    %c0_i32_0 = arith.constant 0 : i32
    %c0_i32_1 = arith.constant 0 : i32
    return %c0_i32, %c0_i32_0 : i32, i32
  }
  func.func @transform_7(%arg0: i32) -> (i32, i32) {
    %c0_i32 = arith.constant 0 : i32
    %c0_i32_0 = arith.constant 0 : i32
    %c0_i32_1 = arith.constant 0 : i32
    return %c0_i32, %c0_i32_0 : i32, i32
  }
  func.func @transform_8(%arg0: i32) -> (i32, i32) {
    %c0_i32 = arith.constant 0 : i32
    %c0_i32_0 = arith.constant 0 : i32
    %c0_i32_1 = arith.constant 0 : i32
    return %c0_i32, %c0_i32_0 : i32, i32
  }
  func.func @transform_9(%arg0: i32) -> (i32, i32) {
    %c0_i32 = arith.constant 0 : i32
    %c0_i32_0 = arith.constant 0 : i32
    return %arg0, %c0_i32 : i32, i32
  }
  func.func @transform_10(%arg0: i32) -> (i32, i32) {
    %c0_i32 = arith.constant 0 : i32
    %c0_i32_0 = arith.constant 0 : i32
    return %arg0, %c0_i32 : i32, i32
  }
}

</mosaic_0001>

<llo_original>
// kernel: tpu_custom_call.1
$region0: #{tpu_custom_call.1}
  #allocation0 [shape = 'u32[]', space=smem, size = 0x4, offset = 0x4, fixed_abs, tag = 'smem constant byte address 0x4 - core index']
  #allocation1 [shape = 'u32[144,128]{1,0:T(1,128)}', space=vmem, size = 0x12000, scoped, tag = 'internal scratch']
  %s0 = inlined_call_operand.vmem [shape: f32[8,32], index: 0, kind: input, shape index: {}]
  %s1 = inlined_call_operand.vmem [shape: f32[32,128], index: 1, kind: input, shape index: {}]
  %s2 = inlined_call_operand.vmem [shape: f32[1,128], index: 2, kind: input, shape index: {}]
  %s3 = inlined_call_operand.vmem [shape: f32[128,10], index: 3, kind: input, shape index: {}]
  %s4 = inlined_call_operand.vmem [shape: f32[1,10], index: 4, kind: input, shape index: {}]
  %s5 = inlined_call_operand.vmem [shape: f32[128,128], index: 5, kind: input, shape index: {}]
  %s6 = inlined_call_operand.vmem [shape: f32[1,128], index: 6, kind: input, shape index: {}]
  %s7 = inlined_call_operand.vmem [shape: f32[128,32], index: 7, kind: input, shape index: {}]
  %s8 = inlined_call_operand.vmem [shape: f32[1,32], index: 8, kind: input, shape index: {}]
  %s9 = inlined_call_operand.hbm [shape: f32[8,32], index: 9, kind: output, shape index: {0}]
  %s10 = inlined_call_operand.hbm [shape: f32[8,10], index: 10, kind: output, shape index: {1}]
  %11 = xla_tuple %s9, %s10
  %s12 = sld [smem:[#allocation0]]
  $region54: #{tpu_custom_call.1} parent=0
    _
  %s14 = ssub.s32 1, %s12
  %s15 = scalar_select 0, %s14, %s12
  $region1: #{tpu_custom_call.1} parent=0
    #allocation2 [shape = 'u8[4096]{0}', space=vmem, size = 0x1000, scoped, tag = 'output window, operand 0, single buffered']
    #allocation3 [shape = 's32[1]{0}', space=sflag, size = 0x4, scoped, tag = 'scoped memory for tpu_custom_call.1']
    #allocation4 [shape = 'u8[4096]{0}', space=vmem, size = 0x1000, scoped, tag = 'output window, operand 1, single buffered']
    #allocation5 [shape = 's32[1]{0}', space=sflag, size = 0x4, scoped, tag = 'scoped memory for tpu_custom_call.1']
    %16 = vsyncpa [#allocation3], 0
    %17 = vsyncpa [#allocation5], 0
    // Predicated region
    $region2: #{tpu_custom_call.1} parent=1 // pred_check
      _
    $region3: #{tpu_custom_call.1} parent=1 // pred_check_branch
      %19 = sbr.rel (0) target = $region5
    $region4: #{tpu_custom_call.1} parent=1 // pred_region
      _
    $region5: #{tpu_custom_call.1} parent=1 // pred_fallthru
      _
    // Predicated region
    $region6: #{tpu_custom_call.1} parent=1 // pred_check
      _
    $region7: #{tpu_custom_call.1} parent=1 // pred_check_branch
      %21 = sbr.rel (0) target = $region9
    $region8: #{tpu_custom_call.1} parent=1 // pred_region
      _
    $region9: #{tpu_custom_call.1} parent=1 // pred_fallthru
      _
    // Predicated region
    $region10: #{tpu_custom_call.1} parent=1 // pred_check
      _
    $region11: #{tpu_custom_call.1} parent=1 // pred_check_branch
      %23 = sbr.rel (0) target = $region13
    $region12: #{tpu_custom_call.1} parent=1 // pred_region
      _
    $region13: #{tpu_custom_call.1} parent=1 // pred_fallthru
      _
    // Predicated region
    $region14: #{tpu_custom_call.1} parent=1 // pred_check
      _
    $region15: #{tpu_custom_call.1} parent=1 // pred_check_branch
      %25 = sbr.rel (0) target = $region17
    $region16: #{tpu_custom_call.1} parent=1 // pred_region
      _
    $region17: #{tpu_custom_call.1} parent=1 // pred_fallthru
      _
    // Predicated region
    $region18: #{tpu_custom_call.1} parent=1 // pred_check
      _
    $region19: #{tpu_custom_call.1} parent=1 // pred_check_branch
      %27 = sbr.rel (0) target = $region21
    $region20: #{tpu_custom_call.1} parent=1 // pred_region
      _
    $region21: #{tpu_custom_call.1} parent=1 // pred_fallthru
      _
    // Predicated region
    $region22: #{tpu_custom_call.1} parent=1 // pred_check
      _
    $region23: #{tpu_custom_call.1} parent=1 // pred_check_branch
      %29 = sbr.rel (0) target = $region25
    $region24: #{tpu_custom_call.1} parent=1 // pred_region
      _
    $region25: #{tpu_custom_call.1} parent=1 // pred_fallthru
      _
    // Predicated region
    $region26: #{tpu_custom_call.1} parent=1 // pred_check
      _
    $region27: #{tpu_custom_call.1} parent=1 // pred_check_branch
      %31 = sbr.rel (0) target = $region29
    $region28: #{tpu_custom_call.1} parent=1 // pred_region
      _
    $region29: #{tpu_custom_call.1} parent=1 // pred_fallthru
      _
    // Predicated region
    $region30: #{tpu_custom_call.1} parent=1 // pred_check
      _
    $region31: #{tpu_custom_call.1} parent=1 // pred_check_branch
      %33 = sbr.rel (0) target = $region33
    $region32: #{tpu_custom_call.1} parent=1 // pred_region
      _
    $region33: #{tpu_custom_call.1} parent=1 // pred_fallthru
      _
    // Predicated region
    $region34: #{tpu_custom_call.1} parent=1 // pred_check
      _
    $region35: #{tpu_custom_call.1} parent=1 // pred_check_branch
      %35 = sbr.rel (0) target = $region37
    $region36: #{tpu_custom_call.1} parent=1 // pred_region
      _
    $region37: #{tpu_custom_call.1} parent=1 // pred_fallthru
      _
    %v36 = vld [vmem:[%s0] sm:$0xff]
    %v37 = vld [vmem:[%s1] sm:$0xff]
    %v38 = vld [vmem:[%s1 + $0x8] sm:$0xff]
    %v39 = vld [vmem:[%s1 + $0x10] sm:$0xff]
    %v40 = vld [vmem:[%s1 + $0x18] sm:$0xff]
    %v41 = vld [vmem:[%s2] sm:$0x1]
    %v43 = vlaneseq
    %v44 = vshrl.u32 %v43, 7
    %v45 = vsub.s32 0, %v44
    %v46 = vrot.slane %v41, %v45
    %vm48 = vcmask 261120
    %v50 = vsel %vm48, %v36, 0
    %52 = vmatprep.subr.mxu0 0.0
    %53 = vmatpush1.msra.mxu0 0.0
    %54 = vmatprep.subr.mxu0 0.0
    %55 = vmatpush1.msra.mxu0 0.0
    %56 = vmatprep.subr.mxu0 0.0
    %57 = vmatpush1.msra.mxu0 0.0
    %58 = vmatprep.subr.mxu0 0.0
    %59 = vmatpush1.msra.mxu0 0.0
    %60 = vmatprep.subr.mxu0 0.0
    %61 = vmatpush1.msra.mxu0 0.0
    %62 = vmatprep.subr.mxu0 0.0
    %63 = vmatpush1.msra.mxu0 0.0
    %64 = vmatprep.subr.mxu0 0.0
    %65 = vmatpush1.msra.mxu0 0.0
    %66 = vmatprep.subr.mxu0 0.0
    %67 = vmatpush1.msra.mxu0 0.0
    %68 = vmatprep.subr.mxu0 0.0
    %69 = vmatpush1.msra.mxu0 0.0
    %70 = vmatprep.subr.mxu0 0.0
    %71 = vmatpush1.msra.mxu0 0.0
    %72 = vmatprep.subr.mxu0 0.0
    %73 = vmatpush1.msra.mxu0 0.0
    %74 = vmatprep.subr.mxu0 0.0
    %75 = vmatpush1.msra.mxu0 0.0
    %76 = vmatprep.subr.mxu0 0.0
    %77 = vmatpush1.msra.mxu0 %v40
    %78 = vmatprep.subr.mxu0 0.0
    %79 = vmatpush1.msra.mxu0 %v39
    %80 = vmatprep.subr.mxu0 0.0
    %81 = vmatpush1.msra.mxu0 %v38
    %82 = vmatprep.subr.mxu0 0.0
    %83 = vmatpush1.msra.mxu0 %v37
    %84 = vmatprep.subr.mxu0 0.0
    %85 = vmatpush2.msra.mxu0 0.0
    %86 = vmatprep.subr.mxu0 0.0
    %87 = vmatpush2.msra.mxu0 0.0
    %88 = vmatprep.subr.mxu0 0.0
    %89 = vmatpush2.msra.mxu0 0.0
    %90 = vmatprep.subr.mxu0 0.0
    %91 = vmatpush2.msra.mxu0 0.0
    %92 = vmatprep.subr.mxu0 0.0
    %93 = vmatpush2.msra.mxu0 0.0
    %94 = vmatprep.subr.mxu0 0.0
    %95 = vmatpush2.msra.mxu0 0.0
    %96 = vmatprep.subr.mxu0 0.0
    %97 = vmatpush2.msra.mxu0 0.0
    %98 = vmatprep.subr.mxu0 0.0
    %99 = vmatpush2.msra.mxu0 0.0
    %100 = vmatprep.subr.mxu0 0.0
    %101 = vmatpush2.msra.mxu0 0.0
    %102 = vmatprep.subr.mxu0 0.0
    %103 = vmatpush2.msra.mxu0 0.0
    %104 = vmatprep.subr.mxu0 0.0
    %105 = vmatpush2.msra.mxu0 0.0
    %106 = vmatprep.subr.mxu0 0.0
    %107 = vmatpush2.msra.mxu0 0.0
    %108 = vmatprep.subr.mxu0 0.0
    %109 = vmatpush2.msra.mxu0 0.0
    %110 = vmatprep.subr.mxu0 0.0
    %111 = vmatpush2.msra.mxu0 0.0
    %112 = vmatprep.subr.mxu0 0.0
    %113 = vmatpush2.msra.mxu0 0.0
    %114 = vmatprep.subr.mxu0 0.0
    %115 = vmatpush2.msra.mxu0 0.0
    %116 = vmatprep.mubr.f32.mxu0 0.0
    %117 = vmatmul.mubr.f32.gmra.mxu0 %v50
    %v118 = vpop.f32.mrf.mxu0
    %v119 = vadd.f32 %v46, %v118
    %v120 = vpop.f32.mrf.mxu0
    %121 = vdwg.mxu0
    %v122 = vmax.f32 %v119, 0.0
    %v123 = vld [vmem:[%s3] sm:$0xff]
    %v124 = vld [vmem:[%s3 + $0x8] sm:$0xff]
    %v125 = vld [vmem:[%s3 + $0x10] sm:$0xff]
    %v126 = vld [vmem:[%s3 + $0x18] sm:$0xff]
    %v127 = vld [vmem:[%s3 + $0x20] sm:$0xff]
    %v128 = vld [vmem:[%s3 + $0x28] sm:$0xff]
    %v129 = vld [vmem:[%s3 + $0x30] sm:$0xff]
    %v130 = vld [vmem:[%s3 + $0x38] sm:$0xff]
    %v131 = vld [vmem:[%s3 + $0x40] sm:$0xff]
    %v132 = vld [vmem:[%s3 + $0x48] sm:$0xff]
    %v133 = vld [vmem:[%s3 + $0x50] sm:$0xff]
    %v134 = vld [vmem:[%s3 + $0x58] sm:$0xff]
    %v135 = vld [vmem:[%s3 + $0x60] sm:$0xff]
    %v136 = vld [vmem:[%s3 + $0x68] sm:$0xff]
    %v137 = vld [vmem:[%s3 + $0x70] sm:$0xff]
    %v138 = vld [vmem:[%s3 + $0x78] sm:$0xff]
    %v139 = vld [vmem:[%s4] sm:$0x1]
    %v141 = vlaneseq
    %v142 = vshrl.u32 %v141, 7
    %v143 = vsub.s32 0, %v142
    %v144 = vrot.slane %v139, %v143
    %146 = vmatprep.subr.mxu0 0.0
    %147 = vmatpush1.msra.mxu0 %v138
    %148 = vmatprep.subr.mxu0 0.0
    %149 = vmatpush1.msra.mxu0 %v137
    %150 = vmatprep.subr.mxu0 0.0
    %151 = vmatpush1.msra.mxu0 %v136
    %152 = vmatprep.subr.mxu0 0.0
    %153 = vmatpush1.msra.mxu0 %v135
    %154 = vmatprep.subr.mxu0 0.0
    %155 = vmatpush1.msra.mxu0 %v134
    %156 = vmatprep.subr.mxu0 0.0
    %157 = vmatpush1.msra.mxu0 %v133
    %158 = vmatprep.subr.mxu0 0.0
    %159 = vmatpush1.msra.mxu0 %v132
    %160 = vmatprep.subr.mxu0 0.0
    %161 = vmatpush1.msra.mxu0 %v131
    %162 = vmatprep.subr.mxu0 0.0
    %163 = vmatpush1.msra.mxu0 %v130
    %164 = vmatprep.subr.mxu0 0.0
    %165 = vmatpush1.msra.mxu0 %v129
    %166 = vmatprep.subr.mxu0 0.0
    %167 = vmatpush1.msra.mxu0 %v128
    %168 = vmatprep.subr.mxu0 0.0
    %169 = vmatpush1.msra.mxu0 %v127
    %170 = vmatprep.subr.mxu0 0.0
    %171 = vmatpush1.msra.mxu0 %v126
    %172 = vmatprep.subr.mxu0 0.0
    %173 = vmatpush1.msra.mxu0 %v125
    %174 = vmatprep.subr.mxu0 0.0
    %175 = vmatpush1.msra.mxu0 %v124
    %176 = vmatprep.subr.mxu0 0.0
    %177 = vmatpush1.msra.mxu0 %v123
    %178 = vmatprep.subr.mxu0 0.0
    %179 = vmatpush2.msra.mxu0 0.0
    %180 = vmatprep.subr.mxu0 0.0
    %181 = vmatpush2.msra.mxu0 0.0
    %182 = vmatprep.subr.mxu0 0.0
    %183 = vmatpush2.msra.mxu0 0.0
    %184 = vmatprep.subr.mxu0 0.0
    %185 = vmatpush2.msra.mxu0 0.0
    %186 = vmatprep.subr.mxu0 0.0
    %187 = vmatpush2.msra.mxu0 0.0
    %188 = vmatprep.subr.mxu0 0.0
    %189 = vmatpush2.msra.mxu0 0.0
    %190 = vmatprep.subr.mxu0 0.0
    %191 = vmatpush2.msra.mxu0 0.0
    %192 = vmatprep.subr.mxu0 0.0
    %193 = vmatpush2.msra.mxu0 0.0
    %194 = vmatprep.subr.mxu0 0.0
    %195 = vmatpush2.msra.mxu0 0.0
    %196 = vmatprep.subr.mxu0 0.0
    %197 = vmatpush2.msra.mxu0 0.0
    %198 = vmatprep.subr.mxu0 0.0
    %199 = vmatpush2.msra.mxu0 0.0
    %200 = vmatprep.subr.mxu0 0.0
    %201 = vmatpush2.msra.mxu0 0.0
    %202 = vmatprep.subr.mxu0 0.0
    %203 = vmatpush2.msra.mxu0 0.0
    %204 = vmatprep.subr.mxu0 0.0
    %205 = vmatpush2.msra.mxu0 0.0
    %206 = vmatprep.subr.mxu0 0.0
    %207 = vmatpush2.msra.mxu0 0.0
    %208 = vmatprep.subr.mxu0 0.0
    %209 = vmatpush2.msra.mxu0 0.0
    %210 = vmatprep.mubr.f32.mxu0 0.0
    %211 = vmatmul.mubr.f32.gmra.mxu0 %v122
    %v212 = vpop.f32.mrf.mxu0
    %v213 = vadd.f32 %v144, %v212
    %v214 = vpop.f32.mrf.mxu0
    %215 = vdwg.mxu0
    %v216 = vld [vmem:[%s5] sm:$0xff]
    %v217 = vld [vmem:[%s5 + $0x8] sm:$0xff]
    %v218 = vld [vmem:[%s5 + $0x10] sm:$0xff]
    %v219 = vld [vmem:[%s5 + $0x18] sm:$0xff]
    %v220 = vld [vmem:[%s5 + $0x20] sm:$0xff]
    %v221 = vld [vmem:[%s5 + $0x28] sm:$0xff]
    %v222 = vld [vmem:[%s5 + $0x30] sm:$0xff]
    %v223 = vld [vmem:[%s5 + $0x38] sm:$0xff]
    %v224 = vld [vmem:[%s5 + $0x40] sm:$0xff]
    %v225 = vld [vmem:[%s5 + $0x48] sm:$0xff]
    %v226 = vld [vmem:[%s5 + $0x50] sm:$0xff]
    %v227 = vld [vmem:[%s5 + $0x58] sm:$0xff]
    %v228 = vld [vmem:[%s5 + $0x60] sm:$0xff]
    %v229 = vld [vmem:[%s5 + $0x68] sm:$0xff]
    %v230 = vld [vmem:[%s5 + $0x70] sm:$0xff]
    %v231 = vld [vmem:[%s5 + $0x78] sm:$0xff]
    %v232 = vld [vmem:[%s6] sm:$0x1]
    %v234 = vlaneseq
    %v235 = vshrl.u32 %v234, 7
    %v236 = vsub.s32 0, %v235
    %v237 = vrot.slane %v232, %v236
    %239 = vmatprep.subr.mxu0 0.0
    %240 = vmatpush1.msra.mxu0 %v231
    %241 = vmatprep.subr.mxu0 0.0
    %242 = vmatpush1.msra.mxu0 %v230
    %243 = vmatprep.subr.mxu0 0.0
    %244 = vmatpush1.msra.mxu0 %v229
    %245 = vmatprep.subr.mxu0 0.0
    %246 = vmatpush1.msra.mxu0 %v228
    %247 = vmatprep.subr.mxu0 0.0
    %248 = vmatpush1.msra.mxu0 %v227
    %249 = vmatprep.subr.mxu0 0.0
    %250 = vmatpush1.msra.mxu0 %v226
    %251 = vmatprep.subr.mxu0 0.0
    %252 = vmatpush1.msra.mxu0 %v225
    %253 = vmatprep.subr.mxu0 0.0
    %254 = vmatpush1.msra.mxu0 %v224
    %255 = vmatprep.subr.mxu0 0.0
    %256 = vmatpush1.msra.mxu0 %v223
    %257 = vmatprep.subr.mxu0 0.0
    %258 = vmatpush1.msra.mxu0 %v222
    %259 = vmatprep.subr.mxu0 0.0
    %260 = vmatpush1.msra.mxu0 %v221
    %261 = vmatprep.subr.mxu0 0.0
    %262 = vmatpush1.msra.mxu0 %v220
    %263 = vmatprep.subr.mxu0 0.0
    %264 = vmatpush1.msra.mxu0 %v219
    %265 = vmatprep.subr.mxu0 0.0
    %266 = vmatpush1.msra.mxu0 %v218
    %267 = vmatprep.subr.mxu0 0.0
    %268 = vmatpush1.msra.mxu0 %v217
    %269 = vmatprep.subr.mxu0 0.0
    %270 = vmatpush1.msra.mxu0 %v216
    %271 = vmatprep.subr.mxu0 0.0
    %272 = vmatpush2.msra.mxu0 0.0
    %273 = vmatprep.subr.mxu0 0.0
    %274 = vmatpush2.msra.mxu0 0.0
    %275 = vmatprep.subr.mxu0 0.0
    %276 = vmatpush2.msra.mxu0 0.0
    %277 = vmatprep.subr.mxu0 0.0
    %278 = vmatpush2.msra.mxu0 0.0
    %279 = vmatprep.subr.mxu0 0.0
    %280 = vmatpush2.msra.mxu0 0.0
    %281 = vmatprep.subr.mxu0 0.0
    %282 = vmatpush2.msra.mxu0 0.0
    %283 = vmatprep.subr.mxu0 0.0
    %284 = vmatpush2.msra.mxu0 0.0
    %285 = vmatprep.subr.mxu0 0.0
    %286 = vmatpush2.msra.mxu0 0.0
    %287 = vmatprep.subr.mxu0 0.0
    %288 = vmatpush2.msra.mxu0 0.0
    %289 = vmatprep.subr.mxu0 0.0
    %290 = vmatpush2.msra.mxu0 0.0
    %291 = vmatprep.subr.mxu0 0.0
    %292 = vmatpush2.msra.mxu0 0.0
    %293 = vmatprep.subr.mxu0 0.0
    %294 = vmatpush2.msra.mxu0 0.0
    %295 = vmatprep.subr.mxu0 0.0
    %296 = vmatpush2.msra.mxu0 0.0
    %297 = vmatprep.subr.mxu0 0.0
    %298 = vmatpush2.msra.mxu0 0.0
    %299 = vmatprep.subr.mxu0 0.0
    %300 = vmatpush2.msra.mxu0 0.0
    %301 = vmatprep.subr.mxu0 0.0
    %302 = vmatpush2.msra.mxu0 0.0
    %303 = vmatprep.mubr.f32.mxu0 0.0
    %304 = vmatmul.mubr.f32.gmra.mxu0 %v122
    %v305 = vpop.f32.mrf.mxu0
    %v306 = vadd.f32 %v237, %v305
    %v307 = vpop.f32.mrf.mxu0
    %308 = vdwg.mxu0
    %v309 = vmax.f32 %v306, 0.0
    %v310 = vld [vmem:[%s7] sm:$0xff]
    %v311 = vld [vmem:[%s7 + $0x8] sm:$0xff]
    %v312 = vld [vmem:[%s7 + $0x10] sm:$0xff]
    %v313 = vld [vmem:[%s7 + $0x18] sm:$0xff]
    %v314 = vld [vmem:[%s7 + $0x20] sm:$0xff]
    %v315 = vld [vmem:[%s7 + $0x28] sm:$0xff]
    %v316 = vld [vmem:[%s7 + $0x30] sm:$0xff]
    %v317 = vld [vmem:[%s7 + $0x38] sm:$0xff]
    %v318 = vld [vmem:[%s7 + $0x40] sm:$0xff]
    %v319 = vld [vmem:[%s7 + $0x48] sm:$0xff]
    %v320 = vld [vmem:[%s7 + $0x50] sm:$0xff]
    %v321 = vld [vmem:[%s7 + $0x58] sm:$0xff]
    %v322 = vld [vmem:[%s7 + $0x60] sm:$0xff]
    %v323 = vld [vmem:[%s7 + $0x68] sm:$0xff]
    %v324 = vld [vmem:[%s7 + $0x70] sm:$0xff]
    %v325 = vld [vmem:[%s7 + $0x78] sm:$0xff]
    %v326 = vld [vmem:[%s8] sm:$0x1]
    %v328 = vlaneseq
    %v329 = vshrl.u32 %v328, 7
    %v330 = vsub.s32 0, %v329
    %v331 = vrot.slane %v326, %v330
    %333 = vmatprep.subr.mxu0 0.0
    %334 = vmatpush1.msra.mxu0 %v325
    %335 = vmatprep.subr.mxu0 0.0
    %336 = vmatpush1.msra.mxu0 %v324
    %337 = vmatprep.subr.mxu0 0.0
    %338 = vmatpush1.msra.mxu0 %v323
    %339 = vmatprep.subr.mxu0 0.0
    %340 = vmatpush1.msra.mxu0 %v322
    %341 = vmatprep.subr.mxu0 0.0
    %342 = vmatpush1.msra.mxu0 %v321
    %343 = vmatprep.subr.mxu0 0.0
    %344 = vmatpush1.msra.mxu0 %v320
    %345 = vmatprep.subr.mxu0 0.0
    %346 = vmatpush1.msra.mxu0 %v319
    %347 = vmatprep.subr.mxu0 0.0
    %348 = vmatpush1.msra.mxu0 %v318
    %349 = vmatprep.subr.mxu0 0.0
    %350 = vmatpush1.msra.mxu0 %v317
    %351 = vmatprep.subr.mxu0 0.0
    %352 = vmatpush1.msra.mxu0 %v316
    %353 = vmatprep.subr.mxu0 0.0
    %354 = vmatpush1.msra.mxu0 %v315
    %355 = vmatprep.subr.mxu0 0.0
    %356 = vmatpush1.msra.mxu0 %v314
    %357 = vmatprep.subr.mxu0 0.0
    %358 = vmatpush1.msra.mxu0 %v313
    %359 = vmatprep.subr.mxu0 0.0
    %360 = vmatpush1.msra.mxu0 %v312
    %361 = vmatprep.subr.mxu0 0.0
    %362 = vmatpush1.msra.mxu0 %v311
    %363 = vmatprep.subr.mxu0 0.0
    %364 = vmatpush1.msra.mxu0 %v310
    %365 = vmatprep.subr.mxu0 0.0
    %366 = vmatpush2.msra.mxu0 0.0
    %367 = vmatprep.subr.mxu0 0.0
    %368 = vmatpush2.msra.mxu0 0.0
    %369 = vmatprep.subr.mxu0 0.0
    %370 = vmatpush2.msra.mxu0 0.0
    %371 = vmatprep.subr.mxu0 0.0
    %372 = vmatpush2.msra.mxu0 0.0
    %373 = vmatprep.subr.mxu0 0.0
    %374 = vmatpush2.msra.mxu0 0.0
    %375 = vmatprep.subr.mxu0 0.0
    %376 = vmatpush2.msra.mxu0 0.0
    %377 = vmatprep.subr.mxu0 0.0
    %378 = vmatpush2.msra.mxu0 0.0
    %379 = vmatprep.subr.mxu0 0.0
    %380 = vmatpush2.msra.mxu0 0.0
    %381 = vmatprep.subr.mxu0 0.0
    %382 = vmatpush2.msra.mxu0 0.0
    %383 = vmatprep.subr.mxu0 0.0
    %384 = vmatpush2.msra.mxu0 0.0
    %385 = vmatprep.subr.mxu0 0.0
    %386 = vmatpush2.msra.mxu0 0.0
    %387 = vmatprep.subr.mxu0 0.0
    %388 = vmatpush2.msra.mxu0 0.0
    %389 = vmatprep.subr.mxu0 0.0
    %390 = vmatpush2.msra.mxu0 0.0
    %391 = vmatprep.subr.mxu0 0.0
    %392 = vmatpush2.msra.mxu0 0.0
    %393 = vmatprep.subr.mxu0 0.0
    %394 = vmatpush2.msra.mxu0 0.0
    %395 = vmatprep.subr.mxu0 0.0
    %396 = vmatpush2.msra.mxu0 0.0
    %397 = vmatprep.mubr.f32.mxu0 0.0
    %398 = vmatmul.mubr.f32.gmra.mxu0 %v309
    %v399 = vpop.f32.mrf.mxu0
    %v400 = vadd.f32 %v331, %v399
    %v401 = vpop.f32.mrf.mxu0
    %402 = vdwg.mxu0
    %v403 = vxor.u32 %v400, 2147483648
    %v404 = vmul.f32 %v403, 1.442695
    %v405 = vpow.pop %v404
    %v406 = vadd.f32 %v405, 1.0
    %v407 = vrcp.pop %v406
    %v408 = vmul.f32 1.0, %v407
    %409 = vst.msk [vmem:[#allocation2] sm:$0xff] %vm48, %v408
    %vm410 = vcmask 80896
    %411 = vst.msk [vmem:[#allocation4] sm:$0xff] %vm410, %v213
    // Predicated region
    $region38: #{tpu_custom_call.1} parent=1 // pred_check
      _
    $region39: #{tpu_custom_call.1} parent=1 // pred_check_branch
      %413 = sbr.rel (0) target = $region41
    $region40: #{tpu_custom_call.1} parent=1 // pred_region
      %s415 = ssub.s32 128, 128
      %416 = vsyncadd [#allocation3], %s415
      %s418 = sshll.u32 [#allocation2], 4
      %s419 = int_to_ptr.vmem [resolvable:$true] %s418
      %421 = dma.vmem_to_hbm [thread:$0]  %s419, 128, %s9, [#allocation3]
    $region41: #{tpu_custom_call.1} parent=1 // pred_fallthru
      _
    // Predicated region
    $region42: #{tpu_custom_call.1} parent=1 // pred_check
      _
    $region43: #{tpu_custom_call.1} parent=1 // pred_check_branch
      %423 = sbr.rel (0) target = $region45
    $region44: #{tpu_custom_call.1} parent=1 // pred_region
      %s425 = ssub.s32 128, 128
      %426 = vsyncadd [#allocation5], %s425
      %s428 = sshll.u32 [#allocation4], 4
      %s429 = int_to_ptr.vmem [resolvable:$true] %s428
      %431 = dma.vmem_to_hbm [thread:$0]  %s429, 128, %s10, [#allocation5]
    $region45: #{tpu_custom_call.1} parent=1 // pred_fallthru
      _
    // Predicated region
    $region46: #{tpu_custom_call.1} parent=1 // pred_check
      _
    $region47: #{tpu_custom_call.1} parent=1 // pred_check_branch
      %433 = sbr.rel (0) target = $region49
    $region48: #{tpu_custom_call.1} parent=1 // pred_region
      %434 = dma.done [#allocation3], 128
    $region49: #{tpu_custom_call.1} parent=1 // pred_fallthru
      _
    // Predicated region
    $region50: #{tpu_custom_call.1} parent=1 // pred_check
      _
    $region51: #{tpu_custom_call.1} parent=1 // pred_check_branch
      %436 = sbr.rel (0) target = $region53
    $region52: #{tpu_custom_call.1} parent=1 // pred_region
      %437 = dma.done [#allocation5], 128
    $region53: #{tpu_custom_call.1} parent=1 // pred_fallthru
      _
    %438 = vsyncpa [#allocation3], 1
    %439 = vsyncpa [#allocation5], 1

</llo_original>
